<compile_context>
chip_gen: v7x
topology: tpu7x:2x2x1
jax: 0.10.0
libtpu: 0.0.40
codegen_flags: <defaults>
</compile_context>

<pallas_src>
import functools

import jax
import jax.numpy as jnp
from jax.experimental import pallas as pl
from jax.experimental.pallas import tpu as pltpu


def _apply_nonlin(x, nonlin):
    if nonlin == "identity":
        return x
    if nonlin == "swish":
        return x * jax.nn.sigmoid(x)
    if nonlin == "sigmoid":
        return jax.nn.sigmoid(x)
    if nonlin == "relu":
        return jnp.maximum(x, 0.0)
    raise ValueError(f"unknown nonlinearity: {nonlin}")


def _fused_kernel(feat_ref, gb_ref, out_ref, *, degree_meta, eps, ln_eps,
                  normalization, nonlin):
    """feat_ref/out_ref: (R, tile_b) in I/O dtype; gb_ref: (G, 2) f32 [gamma, beta]."""
    gb = gb_ref[...].astype(jnp.float32)

    for (row_off, gb_off, dim, mul, mul_p) in degree_meta:
        # --- squared norm over the m-components, accumulated slice-by-slice so the
        #     degree's full f32 upcast is never live at once ---
        sq = None
        for d in range(dim):
            lo = row_off + d * mul_p
            sl = feat_ref[lo:lo + mul_p, :].astype(jnp.float32)      # (mul_p, tile_b)
            sq = sl * sl if sq is None else sq + sl * sl
        if normalization == "component":
            sq = sq * (1.0 / dim)

        t = sq + eps
        inv_norm = jax.lax.rsqrt(t)          # EUP slot (cheap)
        norm = t * inv_norm                  # == sqrt(sq + eps)

        # --- LayerNorm over the mul (sublane) axis: one-pass E[x^2]-mu^2 so the two
        #     cross-sublane reductions issue back-to-back; mask padded rows ---
        if mul_p != mul:
            ridx = jax.lax.broadcasted_iota(jnp.int32, norm.shape, 0)
            nm = jnp.where(ridx < mul, norm, 0.0)
        else:
            nm = norm
        s1 = jnp.sum(nm, axis=0, keepdims=True)
        s2 = jnp.sum(nm * nm, axis=0, keepdims=True)
        mu = s1 * (1.0 / mul)
        var = s2 * (1.0 / mul) - mu * mu
        ln = (norm - mu) * jax.lax.rsqrt(var + ln_eps)

        gamma = gb[gb_off:gb_off + mul_p, 0:1]                       # (mul_p, 1)
        beta = gb[gb_off:gb_off + mul_p, 1:2]
        ln = ln * gamma + beta

        new_norm = _apply_nonlin(ln, nonlin)
        scale = new_norm * inv_norm          # == new_norm / norm, no divide

        # --- apply the scale, re-reading feat per m-slice (cheap VMEM vld) ---
        for d in range(dim):
            lo = row_off + d * mul_p
            sl = feat_ref[lo:lo + mul_p, :].astype(jnp.float32)
            out_ref[lo:lo + mul_p, :] = (scale * sl).astype(out_ref.dtype)


def _pick_tile_b(B):
    """Lane tile: multiple of 128, capped at 512, >= 2 grid steps when B allows it."""
    if B <= 128:
        return 128
    half = pl.cdiv(B, 2)
    return min(512, ((half + 127) // 128) * 128)


def layer_norm_nonlinearity(x, params, *, eps=1e-6, ln_eps=1e-5,
                            normalization="component", nonlin="identity"):
    """x: dict {l: [B, mul_l, 2l+1]}; params: {l: {'gamma': [mul_l], 'beta': [mul_l]}}."""
    if normalization not in ("norm", "component"):
        raise NotImplementedError(normalization)

    degrees = sorted(x.keys())
    B = x[degrees[0]].shape[0]
    dtype = x[degrees[0]].dtype
    # Sublane packing granularity for the I/O dtype (f32: 8, bf16: 16, int8: 32) so
    # all static sublane slices in the kernel are tile-aligned.
    sub = max(8, 32 // jnp.dtype(dtype).itemsize)

    chunks, gb_chunks, meta = [], [], []
    row_off = gb_off = 0
    for l in degrees:
        feat = x[l]
        _, mul, dim = feat.shape
        mul_p = ((mul + sub - 1) // sub) * sub

        ft = jnp.transpose(feat, (2, 1, 0))                  # (dim, mul, B) lane-dense
        if mul_p != mul:
            ft = jnp.pad(ft, ((0, 0), (0, mul_p - mul), (0, 0)))
        chunks.append(ft.reshape(dim * mul_p, B))

        g = params[l]["gamma"].reshape(mul).astype(jnp.float32)
        b = params[l]["beta"].reshape(mul).astype(jnp.float32)
        if mul_p != mul:
            g = jnp.pad(g, (0, mul_p - mul), constant_values=1.0)
            b = jnp.pad(b, (0, mul_p - mul))
        gb_chunks.append(jnp.stack([g, b], axis=-1))         # (mul_p, 2)

        meta.append((row_off, gb_off, dim, mul, mul_p))
        row_off += dim * mul_p
        gb_off += mul_p

    feat_fused = jnp.concatenate(chunks, axis=0)             # (R, B), I/O dtype
    gb_fused = jnp.concatenate(gb_chunks, axis=0)            # (G, 2), f32
    R, G = row_off, gb_off

    tile_b = _pick_tile_b(B)
    grid = (pl.cdiv(B, tile_b),)

    kernel = functools.partial(
        _fused_kernel, degree_meta=tuple(meta), eps=eps, ln_eps=ln_eps,
        normalization=normalization, nonlin=nonlin)

    out = pl.pallas_call(
        kernel,
        out_shape=jax.ShapeDtypeStruct((R, B), dtype),
        grid=grid,
        in_specs=[pl.BlockSpec((R, tile_b), lambda i: (0, i)),
                  pl.BlockSpec((G, 2), lambda i: (0, 0))],
        out_specs=pl.BlockSpec((R, tile_b), lambda i: (0, i)),
        compiler_params=pltpu.CompilerParams(dimension_semantics=("parallel",)),
    )(feat_fused, gb_fused)

    result = {}
    for l, (ro, go, dim, mul, mul_p) in zip(degrees, meta):
        chunk = out[ro:ro + dim * mul_p].reshape(dim, mul_p, B)
        result[l] = jnp.transpose(chunk[:, :mul, :], (2, 1, 0))     # (B, mul, dim)
    return result


def _reference(x, params, *, eps=1e-6, ln_eps=1e-5,
               normalization="component", nonlin="identity"):
    out = {}
    for l, feat in x.items():
        f = feat.astype(jnp.float32)
        if normalization == "component":
            n2 = jnp.mean(f * f, axis=-1)
        else:
            n2 = jnp.sum(f * f, axis=-1)
        norm = jnp.sqrt(n2 + eps)
        mu = jnp.mean(norm, axis=-1, keepdims=True)
        var = jnp.mean((norm - mu) ** 2, axis=-1, keepdims=True)
        ln = (norm - mu) / jnp.sqrt(var + ln_eps)
        ln = ln * params[l]["gamma"][None, :] + params[l]["beta"][None, :]
        new_norm = _apply_nonlin(ln, nonlin)
        out[l] = ((new_norm / norm)[..., None] * f).astype(feat.dtype)
    return out


if __name__ == "__main__":
    key = jax.random.PRNGKey(0)

    def make_inputs(key, B, muls, dtype):
        x, params = {}, {}
        for l, mul in muls.items():
            dim = 2 * l + 1
            key, k1, k2, k3 = jax.random.split(key, 4)
            x[l] = jax.random.normal(k1, (B, mul, dim), dtype=jnp.float32).astype(dtype)
            params[l] = {
                "gamma": 1.0 + 0.1 * jax.random.normal(k2, (mul,), dtype=jnp.float32),
                "beta": 0.1 * jax.random.normal(k3, (mul,), dtype=jnp.float32),
            }
        return key, x, params

    # case: (name, B, {l: mul}, dtype, nonlin, tol)
    cases = [
        ("f32_small", 2, {0: 8, 1: 16, 2: 8}, jnp.float32, "identity", 2e-5),
        ("f32_ragged", 300, {0: 4, 1: 12, 2: 6}, jnp.float32, "swish", 2e-5),
        ("bf16_multistep", 1024, {0: 8, 1: 16, 2: 8}, jnp.bfloat16, "swish", 3e-2),
    ]

    ok = True
    for name, B, muls, dtype, nonlin, tol in cases:
        key, x, params = make_inputs(key, B, muls, dtype)
        out = layer_norm_nonlinearity(x, params,
                                      normalization="component", nonlin=nonlin)
        out = jax.tree_util.tree_map(jax.block_until_ready, out)
        ref = _reference(x, params, normalization="component", nonlin=nonlin)
        for l in muls:
            o = out[l].astype(jnp.float32)
            r = ref[l].astype(jnp.float32)
            if o.shape != x[l].shape or not jnp.allclose(o, r, atol=tol, rtol=tol):
                ok = False
                err = float(jnp.max(jnp.abs(o - r)))
                print(f"mismatch: case={name} l={l} max_abs_err={err}")

    if ok:
        print("KERNEL_OK")
</pallas_src>

<mosaic_0001>
module attributes {stable_mosaic.version = 11 : i64} {
  func.func @_fused_kernel(%arg0: i32, %arg1: memref<96x128xf32, #tpu.memory_space<vmem>>, %arg2: memref<32x2xf32, #tpu.memory_space<vmem>>, %arg3: memref<96x128xf32, #tpu.memory_space<vmem>>) attributes {dimension_semantics = [#tpu.dimension_semantics<parallel>], iteration_bounds = array<i64: 1>, scalar_prefetch = 0 : i64, scratch_operands = 0 : i64, tpu.core_type = #tpu.core_type<tc>, window_params = [{transform_indices = @transform_0, window_bounds = array<i64: 96, 128>}, {pipeline_mode = #tpu.pipeline_mode<synchronous>, transform_indices = @transform_1, window_bounds = array<i64: 32, 2>}, {transform_indices = @transform_2, window_bounds = array<i64: 96, 128>}]} {
    %c0 = arith.constant 0 : index
    %c0_0 = arith.constant 0 : index
    %0 = vector.load %arg2[%c0, %c0_0] : memref<32x2xf32, #tpu.memory_space<vmem>>, vector<32x2xf32>
    %c0_1 = arith.constant 0 : index
    %c0_2 = arith.constant 0 : index
    %1 = vector.load %arg1[%c0_1, %c0_2] : memref<96x128xf32, #tpu.memory_space<vmem>>, vector<8x128xf32>
    %2 = arith.mulf %1, %1 : vector<8x128xf32>
    %cst = arith.constant 1.000000e+00 : f32
    %3 = vector.broadcast %cst : f32 to vector<8x128xf32>
    %4 = arith.mulf %2, %3 : vector<8x128xf32>
    %cst_3 = arith.constant 9.99999997E-7 : f32
    %5 = vector.broadcast %cst_3 : f32 to vector<8x128xf32>
    %6 = arith.addf %4, %5 : vector<8x128xf32>
    %7 = math.rsqrt %6 : vector<8x128xf32>
    %8 = arith.mulf %6, %7 : vector<8x128xf32>
    %cst_4 = arith.constant dense<0.000000e+00> : vector<128xf32>
    %9 = vector.multi_reduction <add>, %8, %cst_4 [0] : vector<8x128xf32> to vector<128xf32>
    %10 = vector.shape_cast %9 : vector<128xf32> to vector<1x128xf32>
    %11 = arith.mulf %8, %8 : vector<8x128xf32>
    %cst_5 = arith.constant dense<0.000000e+00> : vector<128xf32>
    %12 = vector.multi_reduction <add>, %11, %cst_5 [0] : vector<8x128xf32> to vector<128xf32>
    %13 = vector.shape_cast %12 : vector<128xf32> to vector<1x128xf32>
    %cst_6 = arith.constant 1.250000e-01 : f32
    %14 = vector.broadcast %cst_6 : f32 to vector<1x128xf32>
    %15 = arith.mulf %10, %14 : vector<1x128xf32>
    %cst_7 = arith.constant 1.250000e-01 : f32
    %16 = vector.broadcast %cst_7 : f32 to vector<1x128xf32>
    %17 = arith.mulf %13, %16 : vector<1x128xf32>
    %18 = arith.mulf %15, %15 : vector<1x128xf32>
    %19 = arith.subf %17, %18 : vector<1x128xf32>
    %20 = vector.broadcast %15 : vector<1x128xf32> to vector<8x128xf32>
    %21 = arith.subf %8, %20 : vector<8x128xf32>
    %cst_8 = arith.constant 9.99999974E-6 : f32
    %22 = vector.broadcast %cst_8 : f32 to vector<1x128xf32>
    %23 = arith.addf %19, %22 : vector<1x128xf32>
    %24 = math.rsqrt %23 : vector<1x128xf32>
    %25 = vector.broadcast %24 : vector<1x128xf32> to vector<8x128xf32>
    %26 = arith.mulf %21, %25 : vector<8x128xf32>
    %27 = vector.extract_strided_slice %0 {offsets = [0, 0], sizes = [8, 1], strides = [1, 1]} : vector<32x2xf32> to vector<8x1xf32>
    %28 = vector.extract_strided_slice %0 {offsets = [0, 1], sizes = [8, 1], strides = [1, 1]} : vector<32x2xf32> to vector<8x1xf32>
    %29 = vector.broadcast %27 : vector<8x1xf32> to vector<8x128xf32>
    %30 = arith.mulf %26, %29 : vector<8x128xf32>
    %31 = vector.broadcast %28 : vector<8x1xf32> to vector<8x128xf32>
    %32 = arith.addf %30, %31 : vector<8x128xf32>
    %33 = arith.mulf %32, %7 : vector<8x128xf32>
    %c0_9 = arith.constant 0 : index
    %c0_10 = arith.constant 0 : index
    %34 = vector.load %arg1[%c0_9, %c0_10] : memref<96x128xf32, #tpu.memory_space<vmem>>, vector<8x128xf32>
    %35 = arith.mulf %33, %34 : vector<8x128xf32>
    %c0_11 = arith.constant 0 : index
    %c0_12 = arith.constant 0 : index
    %36 = vector.load %arg3[%c0_11, %c0_12] : memref<96x128xf32, #tpu.memory_space<vmem>>, vector<8x128xf32>
    tpu.vector_store %arg3[%c0_11, %c0_12], %35 {strides = array<i32>} : memref<96x128xf32, #tpu.memory_space<vmem>>, vector<8x128xf32>,
    %c8 = arith.constant 8 : index
    %c0_13 = arith.constant 0 : index
    %37 = vector.load %arg1[%c8, %c0_13] : memref<96x128xf32, #tpu.memory_space<vmem>>, vector<16x128xf32>
    %38 = arith.mulf %37, %37 : vector<16x128xf32>
    %c24 = arith.constant 24 : index
    %c0_14 = arith.constant 0 : index
    %39 = vector.load %arg1[%c24, %c0_14] : memref<96x128xf32, #tpu.memory_space<vmem>>, vector<16x128xf32>
    %40 = arith.mulf %39, %39 : vector<16x128xf32>
    %41 = arith.addf %38, %40 : vector<16x128xf32>
    %c40 = arith.constant 40 : index
    %c0_15 = arith.constant 0 : index
    %42 = vector.load %arg1[%c40, %c0_15] : memref<96x128xf32, #tpu.memory_space<vmem>>, vector<16x128xf32>
    %43 = arith.mulf %42, %42 : vector<16x128xf32>
    %44 = arith.addf %41, %43 : vector<16x128xf32>
    %cst_16 = arith.constant 0.333333343 : f32
    %45 = vector.broadcast %cst_16 : f32 to vector<16x128xf32>
    %46 = arith.mulf %44, %45 : vector<16x128xf32>
    %cst_17 = arith.constant 9.99999997E-7 : f32
    %47 = vector.broadcast %cst_17 : f32 to vector<16x128xf32>
    %48 = arith.addf %46, %47 : vector<16x128xf32>
    %49 = math.rsqrt %48 : vector<16x128xf32>
    %50 = arith.mulf %48, %49 : vector<16x128xf32>
    %cst_18 = arith.constant dense<0.000000e+00> : vector<128xf32>
    %51 = vector.multi_reduction <add>, %50, %cst_18 [0] : vector<16x128xf32> to vector<128xf32>
    %52 = vector.shape_cast %51 : vector<128xf32> to vector<1x128xf32>
    %53 = arith.mulf %50, %50 : vector<16x128xf32>
    %cst_19 = arith.constant dense<0.000000e+00> : vector<128xf32>
    %54 = vector.multi_reduction <add>, %53, %cst_19 [0] : vector<16x128xf32> to vector<128xf32>
    %55 = vector.shape_cast %54 : vector<128xf32> to vector<1x128xf32>
    %cst_20 = arith.constant 6.250000e-02 : f32
    %56 = vector.broadcast %cst_20 : f32 to vector<1x128xf32>
    %57 = arith.mulf %52, %56 : vector<1x128xf32>
    %cst_21 = arith.constant 6.250000e-02 : f32
    %58 = vector.broadcast %cst_21 : f32 to vector<1x128xf32>
    %59 = arith.mulf %55, %58 : vector<1x128xf32>
    %60 = arith.mulf %57, %57 : vector<1x128xf32>
    %61 = arith.subf %59, %60 : vector<1x128xf32>
    %62 = vector.broadcast %57 : vector<1x128xf32> to vector<16x128xf32>
    %63 = arith.subf %50, %62 : vector<16x128xf32>
    %cst_22 = arith.constant 9.99999974E-6 : f32
    %64 = vector.broadcast %cst_22 : f32 to vector<1x128xf32>
    %65 = arith.addf %61, %64 : vector<1x128xf32>
    %66 = math.rsqrt %65 : vector<1x128xf32>
    %67 = vector.broadcast %66 : vector<1x128xf32> to vector<16x128xf32>
    %68 = arith.mulf %63, %67 : vector<16x128xf32>
    %69 = vector.extract_strided_slice %0 {offsets = [8, 0], sizes = [16, 1], strides = [1, 1]} : vector<32x2xf32> to vector<16x1xf32>
    %70 = vector.extract_strided_slice %0 {offsets = [8, 1], sizes = [16, 1], strides = [1, 1]} : vector<32x2xf32> to vector<16x1xf32>
    %71 = vector.broadcast %69 : vector<16x1xf32> to vector<16x128xf32>
    %72 = arith.mulf %68, %71 : vector<16x128xf32>
    %73 = vector.broadcast %70 : vector<16x1xf32> to vector<16x128xf32>
    %74 = arith.addf %72, %73 : vector<16x128xf32>
    %75 = arith.mulf %74, %49 : vector<16x128xf32>
    %c8_23 = arith.constant 8 : index
    %c0_24 = arith.constant 0 : index
    %76 = vector.load %arg1[%c8_23, %c0_24] : memref<96x128xf32, #tpu.memory_space<vmem>>, vector<16x128xf32>
    %77 = arith.mulf %75, %76 : vector<16x128xf32>
    %c8_25 = arith.constant 8 : index
    %c0_26 = arith.constant 0 : index
    %78 = vector.load %arg3[%c8_25, %c0_26] : memref<96x128xf32, #tpu.memory_space<vmem>>, vector<16x128xf32>
    tpu.vector_store %arg3[%c8_25, %c0_26], %77 {strides = array<i32>} : memref<96x128xf32, #tpu.memory_space<vmem>>, vector<16x128xf32>,
    %c24_27 = arith.constant 24 : index
    %c0_28 = arith.constant 0 : index
    %79 = vector.load %arg1[%c24_27, %c0_28] : memref<96x128xf32, #tpu.memory_space<vmem>>, vector<16x128xf32>
    %80 = arith.mulf %75, %79 : vector<16x128xf32>
    %c24_29 = arith.constant 24 : index
    %c0_30 = arith.constant 0 : index
    %81 = vector.load %arg3[%c24_29, %c0_30] : memref<96x128xf32, #tpu.memory_space<vmem>>, vector<16x128xf32>
    tpu.vector_store %arg3[%c24_29, %c0_30], %80 {strides = array<i32>} : memref<96x128xf32, #tpu.memory_space<vmem>>, vector<16x128xf32>,
    %c40_31 = arith.constant 40 : index
    %c0_32 = arith.constant 0 : index
    %82 = vector.load %arg1[%c40_31, %c0_32] : memref<96x128xf32, #tpu.memory_space<vmem>>, vector<16x128xf32>
    %83 = arith.mulf %75, %82 : vector<16x128xf32>
    %c40_33 = arith.constant 40 : index
    %c0_34 = arith.constant 0 : index
    %84 = vector.load %arg3[%c40_33, %c0_34] : memref<96x128xf32, #tpu.memory_space<vmem>>, vector<16x128xf32>
    tpu.vector_store %arg3[%c40_33, %c0_34], %83 {strides = array<i32>} : memref<96x128xf32, #tpu.memory_space<vmem>>, vector<16x128xf32>,
    %c56 = arith.constant 56 : index
    %c0_35 = arith.constant 0 : index
    %85 = vector.load %arg1[%c56, %c0_35] : memref<96x128xf32, #tpu.memory_space<vmem>>, vector<8x128xf32>
    %86 = arith.mulf %85, %85 : vector<8x128xf32>
    %c64 = arith.constant 64 : index
    %c0_36 = arith.constant 0 : index
    %87 = vector.load %arg1[%c64, %c0_36] : memref<96x128xf32, #tpu.memory_space<vmem>>, vector<8x128xf32>
    %88 = arith.mulf %87, %87 : vector<8x128xf32>
    %89 = arith.addf %86, %88 : vector<8x128xf32>
    %c72 = arith.constant 72 : index
    %c0_37 = arith.constant 0 : index
    %90 = vector.load %arg1[%c72, %c0_37] : memref<96x128xf32, #tpu.memory_space<vmem>>, vector<8x128xf32>
    %91 = arith.mulf %90, %90 : vector<8x128xf32>
    %92 = arith.addf %89, %91 : vector<8x128xf32>
    %c80 = arith.constant 80 : index
    %c0_38 = arith.constant 0 : index
    %93 = vector.load %arg1[%c80, %c0_38] : memref<96x128xf32, #tpu.memory_space<vmem>>, vector<8x128xf32>
    %94 = arith.mulf %93, %93 : vector<8x128xf32>
    %95 = arith.addf %92, %94 : vector<8x128xf32>
    %c88 = arith.constant 88 : index
    %c0_39 = arith.constant 0 : index
    %96 = vector.load %arg1[%c88, %c0_39] : memref<96x128xf32, #tpu.memory_space<vmem>>, vector<8x128xf32>
    %97 = arith.mulf %96, %96 : vector<8x128xf32>
    %98 = arith.addf %95, %97 : vector<8x128xf32>
    %cst_40 = arith.constant 2.000000e-01 : f32
    %99 = vector.broadcast %cst_40 : f32 to vector<8x128xf32>
    %100 = arith.mulf %98, %99 : vector<8x128xf32>
    %cst_41 = arith.constant 9.99999997E-7 : f32
    %101 = vector.broadcast %cst_41 : f32 to vector<8x128xf32>
    %102 = arith.addf %100, %101 : vector<8x128xf32>
    %103 = math.rsqrt %102 : vector<8x128xf32>
    %104 = arith.mulf %102, %103 : vector<8x128xf32>
    %cst_42 = arith.constant dense<0.000000e+00> : vector<128xf32>
    %105 = vector.multi_reduction <add>, %104, %cst_42 [0] : vector<8x128xf32> to vector<128xf32>
    %106 = vector.shape_cast %105 : vector<128xf32> to vector<1x128xf32>
    %107 = arith.mulf %104, %104 : vector<8x128xf32>
    %cst_43 = arith.constant dense<0.000000e+00> : vector<128xf32>
    %108 = vector.multi_reduction <add>, %107, %cst_43 [0] : vector<8x128xf32> to vector<128xf32>
    %109 = vector.shape_cast %108 : vector<128xf32> to vector<1x128xf32>
    %cst_44 = arith.constant 1.250000e-01 : f32
    %110 = vector.broadcast %cst_44 : f32 to vector<1x128xf32>
    %111 = arith.mulf %106, %110 : vector<1x128xf32>
    %cst_45 = arith.constant 1.250000e-01 : f32
    %112 = vector.broadcast %cst_45 : f32 to vector<1x128xf32>
    %113 = arith.mulf %109, %112 : vector<1x128xf32>
    %114 = arith.mulf %111, %111 : vector<1x128xf32>
    %115 = arith.subf %113, %114 : vector<1x128xf32>
    %116 = vector.broadcast %111 : vector<1x128xf32> to vector<8x128xf32>
    %117 = arith.subf %104, %116 : vector<8x128xf32>
    %cst_46 = arith.constant 9.99999974E-6 : f32
    %118 = vector.broadcast %cst_46 : f32 to vector<1x128xf32>
    %119 = arith.addf %115, %118 : vector<1x128xf32>
    %120 = math.rsqrt %119 : vector<1x128xf32>
    %121 = vector.broadcast %120 : vector<1x128xf32> to vector<8x128xf32>
    %122 = arith.mulf %117, %121 : vector<8x128xf32>
    %123 = vector.extract_strided_slice %0 {offsets = [24, 0], sizes = [8, 1], strides = [1, 1]} : vector<32x2xf32> to vector<8x1xf32>
    %124 = vector.extract_strided_slice %0 {offsets = [24, 1], sizes = [8, 1], strides = [1, 1]} : vector<32x2xf32> to vector<8x1xf32>
    %125 = vector.broadcast %123 : vector<8x1xf32> to vector<8x128xf32>
    %126 = arith.mulf %122, %125 : vector<8x128xf32>
    %127 = vector.broadcast %124 : vector<8x1xf32> to vector<8x128xf32>
    %128 = arith.addf %126, %127 : vector<8x128xf32>
    %129 = arith.mulf %128, %103 : vector<8x128xf32>
    %c56_47 = arith.constant 56 : index
    %c0_48 = arith.constant 0 : index
    %130 = vector.load %arg1[%c56_47, %c0_48] : memref<96x128xf32, #tpu.memory_space<vmem>>, vector<8x128xf32>
    %131 = arith.mulf %129, %130 : vector<8x128xf32>
    %c56_49 = arith.constant 56 : index
    %c0_50 = arith.constant 0 : index
    %132 = vector.load %arg3[%c56_49, %c0_50] : memref<96x128xf32, #tpu.memory_space<vmem>>, vector<8x128xf32>
    tpu.vector_store %arg3[%c56_49, %c0_50], %131 {strides = array<i32>} : memref<96x128xf32, #tpu.memory_space<vmem>>, vector<8x128xf32>,
    %c64_51 = arith.constant 64 : index
    %c0_52 = arith.constant 0 : index
    %133 = vector.load %arg1[%c64_51, %c0_52] : memref<96x128xf32, #tpu.memory_space<vmem>>, vector<8x128xf32>
    %134 = arith.mulf %129, %133 : vector<8x128xf32>
    %c64_53 = arith.constant 64 : index
    %c0_54 = arith.constant 0 : index
    %135 = vector.load %arg3[%c64_53, %c0_54] : memref<96x128xf32, #tpu.memory_space<vmem>>, vector<8x128xf32>
    tpu.vector_store %arg3[%c64_53, %c0_54], %134 {strides = array<i32>} : memref<96x128xf32, #tpu.memory_space<vmem>>, vector<8x128xf32>,
    %c72_55 = arith.constant 72 : index
    %c0_56 = arith.constant 0 : index
    %136 = vector.load %arg1[%c72_55, %c0_56] : memref<96x128xf32, #tpu.memory_space<vmem>>, vector<8x128xf32>
    %137 = arith.mulf %129, %136 : vector<8x128xf32>
    %c72_57 = arith.constant 72 : index
    %c0_58 = arith.constant 0 : index
    %138 = vector.load %arg3[%c72_57, %c0_58] : memref<96x128xf32, #tpu.memory_space<vmem>>, vector<8x128xf32>
    tpu.vector_store %arg3[%c72_57, %c0_58], %137 {strides = array<i32>} : memref<96x128xf32, #tpu.memory_space<vmem>>, vector<8x128xf32>,
    %c80_59 = arith.constant 80 : index
    %c0_60 = arith.constant 0 : index
    %139 = vector.load %arg1[%c80_59, %c0_60] : memref<96x128xf32, #tpu.memory_space<vmem>>, vector<8x128xf32>
    %140 = arith.mulf %129, %139 : vector<8x128xf32>
    %c80_61 = arith.constant 80 : index
    %c0_62 = arith.constant 0 : index
    %141 = vector.load %arg3[%c80_61, %c0_62] : memref<96x128xf32, #tpu.memory_space<vmem>>, vector<8x128xf32>
    tpu.vector_store %arg3[%c80_61, %c0_62], %140 {strides = array<i32>} : memref<96x128xf32, #tpu.memory_space<vmem>>, vector<8x128xf32>,
    %c88_63 = arith.constant 88 : index
    %c0_64 = arith.constant 0 : index
    %142 = vector.load %arg1[%c88_63, %c0_64] : memref<96x128xf32, #tpu.memory_space<vmem>>, vector<8x128xf32>
    %143 = arith.mulf %129, %142 : vector<8x128xf32>
    %c88_65 = arith.constant 88 : index
    %c0_66 = arith.constant 0 : index
    %144 = vector.load %arg3[%c88_65, %c0_66] : memref<96x128xf32, #tpu.memory_space<vmem>>, vector<8x128xf32>
    tpu.vector_store %arg3[%c88_65, %c0_66], %143 {strides = array<i32>} : memref<96x128xf32, #tpu.memory_space<vmem>>, vector<8x128xf32>,
    return
  }
  func.func @transform_0(%arg0: i32) -> (i32, i32) {
    %c0_i32 = arith.constant 0 : i32
    %c0_i32_0 = arith.constant 0 : i32
    return %c0_i32, %arg0 : i32, i32
  }
  func.func @transform_1(%arg0: i32) -> (i32, i32) {
    %c0_i32 = arith.constant 0 : i32
    %c0_i32_0 = arith.constant 0 : i32
    %c0_i32_1 = arith.constant 0 : i32
    return %c0_i32, %c0_i32_0 : i32, i32
  }
  func.func @transform_2(%arg0: i32) -> (i32, i32) {
    %c0_i32 = arith.constant 0 : i32
    %c0_i32_0 = arith.constant 0 : i32
    return %c0_i32, %arg0 : i32, i32
  }
}

</mosaic_0001>

<llo_original>
// kernel: tpu_custom_call.1
$region0: #{tpu_custom_call.1}
  #allocation0 [shape = 'u32[]', space=smem, size = 0x4, offset = 0x4, fixed_abs, tag = 'smem constant byte address 0x4 - core index']
  #allocation1 [shape = 'u32[144,128]{1,0:T(1,128)}', space=vmem, size = 0x12000, scoped, tag = 'internal scratch']
  %s0 = inlined_call_operand.vmem [shape: f32[96,2], index: 0, kind: input, shape index: {}]
  %s1 = inlined_call_operand.vmem [shape: f32[32,2], index: 1, kind: input, shape index: {}]
  %s2 = inlined_call_operand.vmem [shape: f32[96,2], index: 2, kind: output, shape index: {}]
  %s3 = sld [smem:[#allocation0]]
  $region18: #{tpu_custom_call.1} parent=0
    _
  %s5 = ssub.s32 1, %s3
  %s6 = scalar_select 0, %s5, %s3
  // Predicated region
  $region2: #{tpu_custom_call.1} parent=0 // pred_check
    _
  $region3: #{tpu_custom_call.1} parent=0 // pred_check_branch
    %8 = sbr.rel (0) target = $region5
  $region4: #{tpu_custom_call.1} parent=0 // pred_region
    _
  $region5: #{tpu_custom_call.1} parent=0 // pred_fallthru
    _
  // Predicated region
  $region6: #{tpu_custom_call.1} parent=0 // pred_check
    _
  $region7: #{tpu_custom_call.1} parent=0 // pred_check_branch
    %10 = sbr.rel (0) target = $region9
  $region8: #{tpu_custom_call.1} parent=0 // pred_region
    _
  $region9: #{tpu_custom_call.1} parent=0 // pred_fallthru
    _
  %v11 = vld [vmem:[%s1] sm:$0xff]
  %v12 = vld [vmem:[%s1 + $0x8] sm:$0xff]
  %v13 = vld [vmem:[%s1 + $0x10] sm:$0xff]
  %v14 = vld [vmem:[%s1 + $0x18] sm:$0xff]
  %v15 = vld [vmem:[%s0] sm:$0xff]
  %v16 = vmul.f32 %v15, %v15
  %v17 = vadd.f32 %v16, 1e-06
  %v18 = vrsqrt.pop %v17
  %v19 = vmul.f32 %v17, %v18
  %v20 = vrot.slane %v19, 4
  %v21 = vadd.f32 %v19, %v20
  %v22 = vrot.slane %v21, 2
  %v23 = vadd.f32 %v21, %v22
  %v24 = vrot.slane %v23, 1
  %v25 = vadd.f32 %v23, %v24
  %v26 = vmul.f32 %v19, %v19
  %v27 = vrot.slane %v26, 4
  %v28 = vadd.f32 %v26, %v27
  %v29 = vrot.slane %v28, 2
  %v30 = vadd.f32 %v28, %v29
  %v31 = vrot.slane %v30, 1
  %v32 = vadd.f32 %v30, %v31
  %v33 = vmul.f32 %v25, 0.125
  %v34 = vmul.f32 %v32, 0.125
  %v35 = vmul.f32 %v33, %v33
  %v36 = vsub.f32 %v34, %v35
  %v37 = vsub.f32 %v19, %v33
  %v38 = vadd.f32 %v36, 1e-05
  %v39 = vrsqrt.pop %v38
  %v40 = vmul.f32 %v37, %v39
  %42 = vset.pattern.permute.xlu0 0
  %43 = vperm.xlu0 %42, %v11
  %v44 = vpop.permute.xlu0 %43
  %v46 = vmul.f32 %v40, %v44
  %47 = vset.pattern.permute.xlu0 1
  %48 = vperm.xlu0 %47, %v11
  %v49 = vpop.permute.xlu0 %48
  %v51 = vadd.f32 %v46, %v49
  %v52 = vmul.f32 %v51, %v18
  %v53 = vmul.f32 %v52, %v15
  %54 = vst [vmem:[%s2] sm:$0xff] %v53
  %v55 = vld [vmem:[%s0 + $0x8] sm:$0xff]
  %v56 = vld [vmem:[%s0 + $0x10] sm:$0xff]
  %v57 = vmul.f32 %v55, %v55
  %v58 = vmul.f32 %v56, %v56
  %v59 = vld [vmem:[%s0 + $0x18] sm:$0xff]
  %v60 = vld [vmem:[%s0 + $0x20] sm:$0xff]
  %v61 = vmul.f32 %v59, %v59
  %v62 = vmul.f32 %v60, %v60
  %v63 = vadd.f32 %v57, %v61
  %v64 = vadd.f32 %v58, %v62
  %v65 = vld [vmem:[%s0 + $0x28] sm:$0xff]
  %v66 = vld [vmem:[%s0 + $0x30] sm:$0xff]
  %v67 = vmul.f32 %v65, %v65
  %v68 = vmul.f32 %v66, %v66
  %v69 = vadd.f32 %v63, %v67
  %v70 = vadd.f32 %v64, %v68
  %v71 = vmul.f32 %v69, 0.33333334
  %v72 = vmul.f32 %v70, 0.33333334
  %v73 = vadd.f32 %v71, 1e-06
  %v74 = vadd.f32 %v72, 1e-06
  %v75 = vrsqrt.pop %v73
  %v76 = vrsqrt.pop %v74
  %v77 = vmul.f32 %v73, %v75
  %v78 = vmul.f32 %v74, %v76
  %v79 = vadd.f32 %v77, %v78
  %v80 = vrot.slane %v79, 4
  %v81 = vadd.f32 %v79, %v80
  %v82 = vrot.slane %v81, 2
  %v83 = vadd.f32 %v81, %v82
  %v84 = vrot.slane %v83, 1
  %v85 = vadd.f32 %v83, %v84
  %v86 = vmul.f32 %v77, %v77
  %v87 = vmul.f32 %v78, %v78
  %v88 = vadd.f32 %v86, %v87
  %v89 = vrot.slane %v88, 4
  %v90 = vadd.f32 %v88, %v89
  %v91 = vrot.slane %v90, 2
  %v92 = vadd.f32 %v90, %v91
  %v93 = vrot.slane %v92, 1
  %v94 = vadd.f32 %v92, %v93
  %v95 = vmul.f32 %v85, 0.0625
  %v96 = vmul.f32 %v94, 0.0625
  %v97 = vmul.f32 %v95, %v95
  %v98 = vsub.f32 %v96, %v97
  %v99 = vsub.f32 %v77, %v95
  %v100 = vsub.f32 %v78, %v95
  %v101 = vadd.f32 %v98, 1e-05
  %v102 = vrsqrt.pop %v101
  %v103 = vmul.f32 %v99, %v102
  %v104 = vmul.f32 %v100, %v102
  %106 = vset.pattern.permute.xlu0 0
  %107 = vperm.xlu0 %106, %v12
  %v108 = vpop.permute.xlu0 %107
  %111 = vset.pattern.permute.xlu0 0
  %112 = vperm.xlu0 %111, %v13
  %v113 = vpop.permute.xlu0 %112
  %v115 = vmul.f32 %v103, %v108
  %v116 = vmul.f32 %v104, %v113
  %117 = vset.pattern.permute.xlu0 1
  %118 = vperm.xlu0 %117, %v12
  %v119 = vpop.permute.xlu0 %118
  %121 = vset.pattern.permute.xlu0 1
  %122 = vperm.xlu0 %121, %v13
  %v123 = vpop.permute.xlu0 %122
  %v125 = vadd.f32 %v115, %v119
  %v126 = vadd.f32 %v116, %v123
  %v127 = vmul.f32 %v125, %v75
  %v128 = vmul.f32 %v126, %v76
  %v129 = vmul.f32 %v127, %v55
  %v130 = vmul.f32 %v128, %v56
  %131 = vst [vmem:[%s2 + $0x8] sm:$0xff] %v129
  %132 = vst [vmem:[%s2 + $0x10] sm:$0xff] %v130
  %v133 = vld [vmem:[%s0 + $0x18] sm:$0xff]
  %v134 = vld [vmem:[%s0 + $0x20] sm:$0xff]
  %v135 = vmul.f32 %v127, %v133
  %v136 = vmul.f32 %v128, %v134
  %137 = vst [vmem:[%s2 + $0x18] sm:$0xff] %v135
  %138 = vst [vmem:[%s2 + $0x20] sm:$0xff] %v136
  %v139 = vld [vmem:[%s0 + $0x28] sm:$0xff]
  %v140 = vld [vmem:[%s0 + $0x30] sm:$0xff]
  %v141 = vmul.f32 %v127, %v139
  %v142 = vmul.f32 %v128, %v140
  %143 = vst [vmem:[%s2 + $0x28] sm:$0xff] %v141
  %144 = vst [vmem:[%s2 + $0x30] sm:$0xff] %v142
  %v145 = vld [vmem:[%s0 + $0x38] sm:$0xff]
  %v146 = vmul.f32 %v145, %v145
  %v147 = vld [vmem:[%s0 + $0x40] sm:$0xff]
  %v148 = vmul.f32 %v147, %v147
  %v149 = vadd.f32 %v146, %v148
  %v150 = vld [vmem:[%s0 + $0x48] sm:$0xff]
  %v151 = vmul.f32 %v150, %v150
  %v152 = vadd.f32 %v149, %v151
  %v153 = vld [vmem:[%s0 + $0x50] sm:$0xff]
  %v154 = vmul.f32 %v153, %v153
  %v155 = vadd.f32 %v152, %v154
  %v156 = vld [vmem:[%s0 + $0x58] sm:$0xff]
  %v157 = vmul.f32 %v156, %v156
  %v158 = vadd.f32 %v155, %v157
  %v159 = vmul.f32 %v158, 0.2
  %v160 = vadd.f32 %v159, 1e-06
  %v161 = vrsqrt.pop %v160
  %v162 = vmul.f32 %v160, %v161
  %v163 = vrot.slane %v162, 4
  %v164 = vadd.f32 %v162, %v163
  %v165 = vrot.slane %v164, 2
  %v166 = vadd.f32 %v164, %v165
  %v167 = vrot.slane %v166, 1
  %v168 = vadd.f32 %v166, %v167
  %v169 = vmul.f32 %v162, %v162
  %v170 = vrot.slane %v169, 4
  %v171 = vadd.f32 %v169, %v170
  %v172 = vrot.slane %v171, 2
  %v173 = vadd.f32 %v171, %v172
  %v174 = vrot.slane %v173, 1
  %v175 = vadd.f32 %v173, %v174
  %v176 = vmul.f32 %v168, 0.125
  %v177 = vmul.f32 %v175, 0.125
  %v178 = vmul.f32 %v176, %v176
  %v179 = vsub.f32 %v177, %v178
  %v180 = vsub.f32 %v162, %v176
  %v181 = vadd.f32 %v179, 1e-05
  %v182 = vrsqrt.pop %v181
  %v183 = vmul.f32 %v180, %v182
  %185 = vset.pattern.permute.xlu0 0
  %186 = vperm.xlu0 %185, %v14
  %v187 = vpop.permute.xlu0 %186
  %v189 = vmul.f32 %v183, %v187
  %190 = vset.pattern.permute.xlu0 1
  %191 = vperm.xlu0 %190, %v14
  %v192 = vpop.permute.xlu0 %191
  %v194 = vadd.f32 %v189, %v192
  %v195 = vmul.f32 %v194, %v161
  %v196 = vmul.f32 %v195, %v145
  %197 = vst [vmem:[%s2 + $0x38] sm:$0xff] %v196
  %v198 = vld [vmem:[%s0 + $0x40] sm:$0xff]
  %v199 = vmul.f32 %v195, %v198
  %200 = vst [vmem:[%s2 + $0x40] sm:$0xff] %v199
  %v201 = vld [vmem:[%s0 + $0x48] sm:$0xff]
  %v202 = vmul.f32 %v195, %v201
  %203 = vst [vmem:[%s2 + $0x48] sm:$0xff] %v202
  %v204 = vld [vmem:[%s0 + $0x50] sm:$0xff]
  %v205 = vmul.f32 %v195, %v204
  %206 = vst [vmem:[%s2 + $0x50] sm:$0xff] %v205
  %v207 = vld [vmem:[%s0 + $0x58] sm:$0xff]
  %v208 = vmul.f32 %v195, %v207
  %209 = vst [vmem:[%s2 + $0x58] sm:$0xff] %v208
  // Predicated region
  $region10: #{tpu_custom_call.1} parent=0 // pred_check
    _
  $region11: #{tpu_custom_call.1} parent=0 // pred_check_branch
    %211 = sbr.rel (0) target = $region13
  $region12: #{tpu_custom_call.1} parent=0 // pred_region
    _
  $region13: #{tpu_custom_call.1} parent=0 // pred_fallthru
    _
  // Predicated region
  $region14: #{tpu_custom_call.1} parent=0 // pred_check
    _
  $region15: #{tpu_custom_call.1} parent=0 // pred_check_branch
    %213 = sbr.rel (0) target = $region17
  $region16: #{tpu_custom_call.1} parent=0 // pred_region
    _
  $region17: #{tpu_custom_call.1} parent=0 // pred_fallthru
    _

</llo_original>
